<compile_context>
chip_gen: v7x
topology: tpu7x:2x2x1
jax: 0.10.0
libtpu: 0.0.40
codegen_flags: <defaults>
</compile_context>

<pallas_src>
import jax
import jax.numpy as jnp
from jax.experimental import pallas as pl
from jax.experimental.pallas import tpu as pltpu


# ----------------------------------------------------------------------------
# Kernel: 4 MXU matmuls + f32 bias/ReLU.  Works for both the no-grid path
# (refs = full arrays) and the batch-tiled path (x/out refs = one batch tile).
# ----------------------------------------------------------------------------
def _mlp_kernel(x_ref, w1_ref, w2_ref, w3_ref, w4_ref, b_ref, o_ref):
    H = w1_ref.shape[1]          # padded hidden width (multiple of 128)
    C = w4_ref.shape[1]          # padded class width  (multiple of 128)
    wdt = w1_ref.dtype

    b1 = b_ref[0:1, :H]
    b2 = b_ref[1:2, :H]
    b3 = b_ref[2:3, :H]
    b4 = b_ref[3:4, :C]

    h = jnp.dot(x_ref[...].astype(wdt), w1_ref[...],
                preferred_element_type=jnp.float32)
    h = jnp.maximum(h + b1, 0.0)

    h = jnp.dot(h.astype(wdt), w2_ref[...],
                preferred_element_type=jnp.float32)
    h = jnp.maximum(h + b2, 0.0)

    h = jnp.dot(h.astype(wdt), w3_ref[...],
                preferred_element_type=jnp.float32)
    h = jnp.maximum(h + b3, 0.0)

    o_ref[...] = jnp.dot(h.astype(wdt), w4_ref[...],
                         preferred_element_type=jnp.float32) + b4


# ----------------------------------------------------------------------------
# Wrapper
# ----------------------------------------------------------------------------
def _round_up(n, m):
    return (n + m - 1) // m * m


def neural_net_forward(x, prepared, num_classes, *, batch_tile=256):
    """x: [B, input_size] float32.  Returns [B, num_classes] float32."""
    w1, w2, w3, w4, b_stack = prepared
    B, F = x.shape
    C_pad = w4.shape[1]

    if B <= batch_tile:
        # Tiny batch: everything fits trivially in VMEM -> single invocation,
        # no grid, no software-pipeline machinery.
        out = pl.pallas_call(
            _mlp_kernel,
            out_shape=jax.ShapeDtypeStruct((B, C_pad), jnp.float32),
        )(x, w1, w2, w3, w4, b_stack)
    else:
        # Batch-tiled path: grid over batch tiles ("parallel" -> the two
        # TensorCores on v7x each take half); weights/biases stay resident
        # (same block index every iteration -> fetched once).
        B_pad = _round_up(B, batch_tile)
        if B_pad != B:
            x = jnp.pad(x, ((0, B_pad - B), (0, 0)))
        grid = (B_pad // batch_tile,)
        out = pl.pallas_call(
            _mlp_kernel,
            grid=grid,
            in_specs=[
                pl.BlockSpec((batch_tile, F), lambda i: (i, 0)),
                pl.BlockSpec(w1.shape, lambda i: (0, 0)),
                pl.BlockSpec(w2.shape, lambda i: (0, 0)),
                pl.BlockSpec(w3.shape, lambda i: (0, 0)),
                pl.BlockSpec(w4.shape, lambda i: (0, 0)),
                pl.BlockSpec(b_stack.shape, lambda i: (0, 0)),
            ],
            out_specs=pl.BlockSpec((batch_tile, C_pad), lambda i: (i, 0)),
            out_shape=jax.ShapeDtypeStruct((B_pad, C_pad), jnp.float32),
            compiler_params=pltpu.CompilerParams(
                dimension_semantics=("parallel",)),
        )(x, w1, w2, w3, w4, b_stack)
        out = out[:B]

    return out[:, :num_classes]


# ----------------------------------------------------------------------------
# Parameter construction (PyTorch-style raw params) and one-time preprocessing
# ----------------------------------------------------------------------------
def init_params(key, input_size, hidden_size, num_classes):
    """Raw PyTorch-equivalent params.  Linear weights stored as [in, out]."""
    def linear(k, fan_in, fan_out):
        kw, kb = jax.random.split(k)
        bound = 1.0 / jnp.sqrt(jnp.float32(fan_in))
        w = jax.random.uniform(kw, (fan_in, fan_out), jnp.float32, -bound, bound)
        b = jax.random.uniform(kb, (fan_out,), jnp.float32, -bound, bound)
        return w, b

    def bn(k, hidden):
        # Non-trivial stats (as if trained) so the BN fold is actually
        # exercised; a fresh PyTorch BN would be gamma=1, beta=0, mean=0, var=1.
        kg, kb_, km, kv = jax.random.split(k, 4)
        gamma = 1.0 + 0.1 * jax.random.normal(kg, (hidden,), jnp.float32)
        beta = 0.1 * jax.random.normal(kb_, (hidden,), jnp.float32)
        mean = 0.1 * jax.random.normal(km, (hidden,), jnp.float32)
        var = jnp.abs(1.0 + 0.1 * jax.random.normal(kv, (hidden,), jnp.float32))
        return gamma, beta, mean, var

    k1, k2, k3, k4, k5, k6, k7 = jax.random.split(key, 7)
    l1 = linear(k1, input_size, hidden_size)
    l2 = linear(k2, hidden_size, hidden_size)
    l3 = linear(k3, hidden_size, hidden_size)
    l4 = linear(k4, hidden_size, num_classes)
    bn1 = bn(k5, hidden_size)
    bn2 = bn(k6, hidden_size)
    bn3 = bn(k7, hidden_size)
    return l1, l2, l3, l4, bn1, bn2, bn3


def prepare_params(raw, eps=1e-5, lane=128, param_dtype=jnp.float32):
    """One-time offline prep: fold BN into Linear, pad to 128 lanes, stack biases."""
    l1, l2, l3, l4, bn1, bn2, bn3 = raw

    def fold(lin, bnp):
        w, b = lin
        gamma, beta, mean, var = bnp
        s = gamma * jax.lax.rsqrt(var + eps)
        return w * s[None, :], (b - mean) * s + beta

    w1, b1 = fold(l1, bn1)
    w2, b2 = fold(l2, bn2)
    w3, b3 = fold(l3, bn3)
    w4, b4 = l4

    F, H = w1.shape
    C = w4.shape[1]
    Hp = _round_up(H, lane)
    Cp = _round_up(C, lane)

    def pad2(w, rows, cols):
        return jnp.pad(w, ((0, rows - w.shape[0]), (0, cols - w.shape[1])))

    def pad1(b, n):
        return jnp.pad(b, (0, n - b.shape[0]))

    w1p = pad2(w1, F, Hp)
    w2p = pad2(w2, Hp, Hp)
    w3p = pad2(w3, Hp, Hp)
    w4p = pad2(w4, Hp, Cp)

    wmax = max(Hp, Cp)
    b_stack = jnp.stack(
        [pad1(b1, wmax), pad1(b2, wmax), pad1(b3, wmax), pad1(b4, wmax)], axis=0)

    return (w1p.astype(param_dtype), w2p.astype(param_dtype),
            w3p.astype(param_dtype), w4p.astype(param_dtype),
            b_stack.astype(jnp.float32))


# ----------------------------------------------------------------------------
# Plain-JAX eval-mode reference (explicit BN, no folding) for correctness check
# ----------------------------------------------------------------------------
def reference_forward(x, raw, eps=1e-5):
    l1, l2, l3, l4, bn1, bn2, bn3 = raw

    def layer(h, lin, bnp):
        w, b = lin
        gamma, beta, mean, var = bnp
        h = h @ w + b
        h = (h - mean) / jnp.sqrt(var + eps) * gamma + beta
        return jnp.maximum(h, 0.0)          # dropout in eval mode == identity

    h = layer(x, l1, bn1)
    h = layer(h, l2, bn2)
    h = layer(h, l3, bn3)
    w4, b4 = l4
    return h @ w4 + b4


if __name__ == "__main__":
    input_size, hidden_size, num_classes = 32, 64, 10

    key = jax.random.PRNGKey(0)
    kx1, kx2, kp = jax.random.split(key, 3)
    raw = init_params(kp, input_size, hidden_size, num_classes)
    prepared = prepare_params(raw)           # one-time offline preprocessing

    # Path 1: tiny batch -> single full-array call (no grid).
    x_small = jax.random.normal(kx1, (8, input_size), jnp.float32)
    out_small = jax.block_until_ready(
        neural_net_forward(x_small, prepared, num_classes))
    ref_small = reference_forward(x_small, raw)
    assert out_small.shape == (8, num_classes)
    assert jnp.max(jnp.abs(out_small - ref_small)) < 1e-3, "small-batch mismatch"

    # Path 2: larger batch -> batch-tiled grid ("parallel"), resident weights,
    # batch padded to a tile multiple and sliced back.
    x_big = jax.random.normal(kx2, (300, input_size), jnp.float32)
    out_big = jax.block_until_ready(
        neural_net_forward(x_big, prepared, num_classes, batch_tile=256))
    ref_big = reference_forward(x_big, raw)
    assert out_big.shape == (300, num_classes)
    assert jnp.max(jnp.abs(out_big - ref_big)) < 1e-3, "tiled-batch mismatch"

    print("KERNEL_OK")
</pallas_src>

<mosaic_0001>
module attributes {stable_mosaic.version = 11 : i64} {
  func.func @_mlp_kernel(%arg0: memref<8x32xf32, #tpu.memory_space<vmem>>, %arg1: memref<32x128xf32, #tpu.memory_space<vmem>>, %arg2: memref<128x128xf32, #tpu.memory_space<vmem>>, %arg3: memref<128x128xf32, #tpu.memory_space<vmem>>, %arg4: memref<128x128xf32, #tpu.memory_space<vmem>>, %arg5: memref<4x128xf32, #tpu.memory_space<vmem>>, %arg6: memref<8x128xf32, #tpu.memory_space<vmem>>) attributes {dimension_semantics = [], scalar_prefetch = 0 : i64, scratch_operands = 0 : i64, tpu.core_type = #tpu.core_type<tc>} {
    %c0 = arith.constant 0 : index
    %c0_0 = arith.constant 0 : index
    %0 = vector.load %arg5[%c0, %c0_0] : memref<4x128xf32, #tpu.memory_space<vmem>>, vector<1x128xf32>
    %c1 = arith.constant 1 : index
    %c0_1 = arith.constant 0 : index
    %1 = vector.load %arg5[%c1, %c0_1] : memref<4x128xf32, #tpu.memory_space<vmem>>, vector<1x128xf32>
    %c2 = arith.constant 2 : index
    %c0_2 = arith.constant 0 : index
    %2 = vector.load %arg5[%c2, %c0_2] : memref<4x128xf32, #tpu.memory_space<vmem>>, vector<1x128xf32>
    %c3 = arith.constant 3 : index
    %c0_3 = arith.constant 0 : index
    %3 = vector.load %arg5[%c3, %c0_3] : memref<4x128xf32, #tpu.memory_space<vmem>>, vector<1x128xf32>
    %c0_4 = arith.constant 0 : index
    %c0_5 = arith.constant 0 : index
    %4 = vector.load %arg0[%c0_4, %c0_5] : memref<8x32xf32, #tpu.memory_space<vmem>>, vector<8x32xf32>
    %c0_6 = arith.constant 0 : index
    %c0_7 = arith.constant 0 : index
    %5 = vector.load %arg1[%c0_6, %c0_7] : memref<32x128xf32, #tpu.memory_space<vmem>>, vector<32x128xf32>
    %cst = arith.constant dense<0.000000e+00> : vector<8x128xf32>
    %6 = tpu.matmul %4, %5, %cst {dimension_numbers = #tpu.dot_dimension_numbers<[1], [0], [0], [1], [0, 0, 1, 1], [], []>} : vector<8x32xf32>, vector<32x128xf32>, vector<8x128xf32> -> vector<8x128xf32>
    %7 = vector.broadcast %0 : vector<1x128xf32> to vector<8x128xf32>
    %8 = arith.addf %6, %7 : vector<8x128xf32>
    %cst_8 = arith.constant 0.000000e+00 : f32
    %9 = vector.broadcast %cst_8 : f32 to vector<8x128xf32>
    %10 = arith.maximumf %8, %9 : vector<8x128xf32>
    %c0_9 = arith.constant 0 : index
    %c0_10 = arith.constant 0 : index
    %11 = vector.load %arg2[%c0_9, %c0_10] : memref<128x128xf32, #tpu.memory_space<vmem>>, vector<128x128xf32>
    %cst_11 = arith.constant dense<0.000000e+00> : vector<8x128xf32>
    %12 = tpu.matmul %10, %11, %cst_11 {dimension_numbers = #tpu.dot_dimension_numbers<[1], [0], [0], [1], [0, 0, 1, 1], [], []>} : vector<8x128xf32>, vector<128x128xf32>, vector<8x128xf32> -> vector<8x128xf32>
    %13 = vector.broadcast %1 : vector<1x128xf32> to vector<8x128xf32>
    %14 = arith.addf %12, %13 : vector<8x128xf32>
    %cst_12 = arith.constant 0.000000e+00 : f32
    %15 = vector.broadcast %cst_12 : f32 to vector<8x128xf32>
    %16 = arith.maximumf %14, %15 : vector<8x128xf32>
    %c0_13 = arith.constant 0 : index
    %c0_14 = arith.constant 0 : index
    %17 = vector.load %arg3[%c0_13, %c0_14] : memref<128x128xf32, #tpu.memory_space<vmem>>, vector<128x128xf32>
    %cst_15 = arith.constant dense<0.000000e+00> : vector<8x128xf32>
    %18 = tpu.matmul %16, %17, %cst_15 {dimension_numbers = #tpu.dot_dimension_numbers<[1], [0], [0], [1], [0, 0, 1, 1], [], []>} : vector<8x128xf32>, vector<128x128xf32>, vector<8x128xf32> -> vector<8x128xf32>
    %19 = vector.broadcast %2 : vector<1x128xf32> to vector<8x128xf32>
    %20 = arith.addf %18, %19 : vector<8x128xf32>
    %cst_16 = arith.constant 0.000000e+00 : f32
    %21 = vector.broadcast %cst_16 : f32 to vector<8x128xf32>
    %22 = arith.maximumf %20, %21 : vector<8x128xf32>
    %c0_17 = arith.constant 0 : index
    %c0_18 = arith.constant 0 : index
    %23 = vector.load %arg4[%c0_17, %c0_18] : memref<128x128xf32, #tpu.memory_space<vmem>>, vector<128x128xf32>
    %cst_19 = arith.constant dense<0.000000e+00> : vector<8x128xf32>
    %24 = tpu.matmul %22, %23, %cst_19 {dimension_numbers = #tpu.dot_dimension_numbers<[1], [0], [0], [1], [0, 0, 1, 1], [], []>} : vector<8x128xf32>, vector<128x128xf32>, vector<8x128xf32> -> vector<8x128xf32>
    %25 = vector.broadcast %3 : vector<1x128xf32> to vector<8x128xf32>
    %26 = arith.addf %24, %25 : vector<8x128xf32>
    %c0_20 = arith.constant 0 : index
    %c0_21 = arith.constant 0 : index
    %27 = vector.load %arg6[%c0_20, %c0_21] : memref<8x128xf32, #tpu.memory_space<vmem>>, vector<8x128xf32>
    tpu.vector_store %arg6[%c0_20, %c0_21], %26 {strides = array<i32>} : memref<8x128xf32, #tpu.memory_space<vmem>>, vector<8x128xf32>,
    return
  }
}

</mosaic_0001>

<llo_original>
// kernel: tpu_custom_call.1
$region0: #{tpu_custom_call.1}
  #allocation0 [shape = 'u32[]', space=smem, size = 0x4, offset = 0x4, fixed_abs, tag = 'smem constant byte address 0x4 - core index']
  #allocation1 [shape = 'u32[144,128]{1,0:T(1,128)}', space=vmem, size = 0x12000, scoped, tag = 'internal scratch']
  %s0 = inlined_call_operand.hbm [shape: f32[8,32], index: 0, kind: input, shape index: {}]
  %s1 = inlined_call_operand.hbm [shape: f32[32,128], index: 1, kind: input, shape index: {}]
  %s2 = inlined_call_operand.hbm [shape: f32[128,128], index: 2, kind: input, shape index: {}]
  %s3 = inlined_call_operand.hbm [shape: f32[128,128], index: 3, kind: input, shape index: {}]
  %s4 = inlined_call_operand.hbm [shape: f32[128,128], index: 4, kind: input, shape index: {}]
  %s5 = inlined_call_operand.vmem [shape: f32[4,128], index: 5, kind: input, shape index: {}]
  %s6 = inlined_call_operand.hbm [shape: f32[8,128], index: 6, kind: output, shape index: {}]
  %s7 = sld [smem:[#allocation0]]
  $region54: #{tpu_custom_call.1} parent=0
    _
  %s9 = ssub.s32 1, %s7
  %s10 = scalar_select 0, %s9, %s7
  $region1: #{tpu_custom_call.1} parent=0
    #allocation2 [shape = 'u8[4096]{0}', space=vmem, size = 0x1000, scoped, tag = 'input window, operand 0, single buffered']
    #allocation3 [shape = 's32[1]{0}', space=sflag, size = 0x4, scoped, tag = 'scoped memory for tpu_custom_call.1']
    #allocation4 [shape = 's32[1]{0}', space=sflag, size = 0x4, scoped, tag = 'scoped memory for tpu_custom_call.1']
    #allocation5 [shape = 'u8[16384]{0}', space=vmem, size = 0x4000, scoped, tag = 'input window, operand 1, single buffered']
    #allocation6 [shape = 's32[1]{0}', space=sflag, size = 0x4, scoped, tag = 'scoped memory for tpu_custom_call.1']
    #allocation7 [shape = 'u8[65536]{0}', space=vmem, size = 0x10000, scoped, tag = 'input window, operand 2, single buffered']
    #allocation8 [shape = 'u8[65536]{0}', space=vmem, size = 0x10000, scoped, tag = 'input window, operand 3, single buffered']
    #allocation9 [shape = 's32[1]{0}', space=sflag, size = 0x4, scoped, tag = 'scoped memory for tpu_custom_call.1']
    #allocation10 [shape = 'u8[65536]{0}', space=vmem, size = 0x10000, scoped, tag = 'input window, operand 4, single buffered']
    #allocation11 [shape = 'u8[4096]{0}', space=vmem, size = 0x1000, scoped, tag = 'output window, operand 0, single buffered']
    %11 = vsyncpa [#allocation3], 0
    %12 = vsyncpa [#allocation6], 0
    %13 = vsyncpa [#allocation9], 0
    %14 = vsyncpa [#allocation4], 0
    // Predicated region
    $region2: #{tpu_custom_call.1} parent=1 // pred_check
      _
    $region3: #{tpu_custom_call.1} parent=1 // pred_check_branch
      %16 = sbr.rel (0) target = $region5
    $region4: #{tpu_custom_call.1} parent=1 // pred_region
      %s18 = ssub.s32 128, 128
      %19 = vsyncadd [#allocation3], %s18
      %s21 = sshll.u32 [#allocation2], 4
      %s22 = int_to_ptr.vmem [resolvable:$true] %s21
      %24 = dma.hbm_to_vmem [thread:$0]  %s0, 128, %s22, [#allocation3]
    $region5: #{tpu_custom_call.1} parent=1 // pred_fallthru
      _
    // Predicated region
    $region6: #{tpu_custom_call.1} parent=1 // pred_check
      _
    $region7: #{tpu_custom_call.1} parent=1 // pred_check_branch
      %26 = sbr.rel (0) target = $region9
    $region8: #{tpu_custom_call.1} parent=1 // pred_region
      %s28 = ssub.s32 512, 512
      %29 = vsyncadd [#allocation6], %s28
      %s30 = sshll.u32 [#allocation5], 4
      %s31 = int_to_ptr.vmem [resolvable:$true] %s30
      %36 = dma.hbm_to_vmem [thread:$0]  %s1, 512, %s31, [#allocation6], 128, 128, 8
    $region9: #{tpu_custom_call.1} parent=1 // pred_fallthru
      _
    // Predicated region
    $region10: #{tpu_custom_call.1} parent=1 // pred_check
      _
    $region11: #{tpu_custom_call.1} parent=1 // pred_check_branch
      %38 = sbr.rel (0) target = $region13
    $region12: #{tpu_custom_call.1} parent=1 // pred_region
      %s40 = ssub.s32 2048, 2048
      %41 = vsyncadd [#allocation6], %s40
      %s42 = sshll.u32 [#allocation7], 4
      %s43 = int_to_ptr.vmem [resolvable:$true] %s42
      %48 = dma.hbm_to_vmem [thread:$0]  %s2, 2048, %s43, [#allocation6], 128, 128, 8
    $region13: #{tpu_custom_call.1} parent=1 // pred_fallthru
      _
    // Predicated region
    $region14: #{tpu_custom_call.1} parent=1 // pred_check
      _
    $region15: #{tpu_custom_call.1} parent=1 // pred_check_branch
      %50 = sbr.rel (0) target = $region17
    $region16: #{tpu_custom_call.1} parent=1 // pred_region
      %s52 = ssub.s32 2048, 2048
      %53 = vsyncadd [#allocation9], %s52
      %s54 = sshll.u32 [#allocation8], 4
      %s55 = int_to_ptr.vmem [resolvable:$true] %s54
      %60 = dma.hbm_to_vmem [thread:$0]  %s3, 2048, %s55, [#allocation9], 128, 128, 8
    $region17: #{tpu_custom_call.1} parent=1 // pred_fallthru
      _
    // Predicated region
    $region18: #{tpu_custom_call.1} parent=1 // pred_check
      _
    $region19: #{tpu_custom_call.1} parent=1 // pred_check_branch
      %62 = sbr.rel (0) target = $region21
    $region20: #{tpu_custom_call.1} parent=1 // pred_region
      %s64 = ssub.s32 2048, 2048
      %65 = vsyncadd [#allocation9], %s64
      %s66 = sshll.u32 [#allocation10], 4
      %s67 = int_to_ptr.vmem [resolvable:$true] %s66
      %72 = dma.hbm_to_vmem [thread:$0]  %s4, 2048, %s67, [#allocation9], 128, 128, 8
    $region21: #{tpu_custom_call.1} parent=1 // pred_fallthru
      _
    // Predicated region
    $region22: #{tpu_custom_call.1} parent=1 // pred_check
      _
    $region23: #{tpu_custom_call.1} parent=1 // pred_check_branch
      %74 = sbr.rel (0) target = $region25
    $region24: #{tpu_custom_call.1} parent=1 // pred_region
      _
    $region25: #{tpu_custom_call.1} parent=1 // pred_fallthru
      _
    // Predicated region
    $region26: #{tpu_custom_call.1} parent=1 // pred_check
      _
    $region27: #{tpu_custom_call.1} parent=1 // pred_check_branch
      %76 = sbr.rel (0) target = $region29
    $region28: #{tpu_custom_call.1} parent=1 // pred_region
      %77 = dma.done [#allocation3], 128
    $region29: #{tpu_custom_call.1} parent=1 // pred_fallthru
      _
    // Predicated region
    $region30: #{tpu_custom_call.1} parent=1 // pred_check
      _
    $region31: #{tpu_custom_call.1} parent=1 // pred_check_branch
      %79 = sbr.rel (0) target = $region33
    $region32: #{tpu_custom_call.1} parent=1 // pred_region
      %80 = dma.done [#allocation6], 512
    $region33: #{tpu_custom_call.1} parent=1 // pred_fallthru
      _
    // Predicated region
    $region34: #{tpu_custom_call.1} parent=1 // pred_check
      _
    $region35: #{tpu_custom_call.1} parent=1 // pred_check_branch
      %82 = sbr.rel (0) target = $region37
    $region36: #{tpu_custom_call.1} parent=1 // pred_region
      %83 = dma.done [#allocation6], 2048
    $region37: #{tpu_custom_call.1} parent=1 // pred_fallthru
      _
    // Predicated region
    $region38: #{tpu_custom_call.1} parent=1 // pred_check
      _
    $region39: #{tpu_custom_call.1} parent=1 // pred_check_branch
      %85 = sbr.rel (0) target = $region41
    $region40: #{tpu_custom_call.1} parent=1 // pred_region
      %86 = dma.done [#allocation9], 2048
    $region41: #{tpu_custom_call.1} parent=1 // pred_fallthru
      _
    // Predicated region
    $region42: #{tpu_custom_call.1} parent=1 // pred_check
      _
    $region43: #{tpu_custom_call.1} parent=1 // pred_check_branch
      %88 = sbr.rel (0) target = $region45
    $region44: #{tpu_custom_call.1} parent=1 // pred_region
      %89 = dma.done [#allocation9], 2048
    $region45: #{tpu_custom_call.1} parent=1 // pred_fallthru
      _
    %v90 = vld [vmem:[%s5] sm:$0x1]
    %v91 = vld [vmem:[%s5 + $0x1] sm:$0x1]
    %v92 = vld [vmem:[%s5 + $0x2] sm:$0x1]
    %v93 = vld [vmem:[%s5 + $0x3] sm:$0x1]
    %v94 = vld [vmem:[#allocation2] sm:$0xff]
    %v95 = vld [vmem:[#allocation5] sm:$0xff]
    %v96 = vld [vmem:[#allocation5 + $0x8] sm:$0xff]
    %v97 = vld [vmem:[#allocation5 + $0x10] sm:$0xff]
    %v98 = vld [vmem:[#allocation5 + $0x18] sm:$0xff]
    %v99 = vlaneseq
    %v100 = vshrl.u32 %v99, 7
    %v101 = vsub.s32 0, %v100
    %v102 = vrot.slane %v90, %v101
    %vm103 = vcmask 261120
    %v105 = vsel %vm103, %v94, 0
    %107 = vmatprep.subr.mxu0 0.0
    %108 = vmatpush1.msra.mxu0 %v95
    %109 = vmatprep.subr.mxu0 0.0
    %110 = vmatpush1.msra.mxu0 %v96
    %111 = vmatprep.subr.mxu0 0.0
    %112 = vmatpush1.msra.mxu0 %v97
    %113 = vmatprep.subr.mxu0 0.0
    %114 = vmatpush1.msra.mxu0 %v98
    %115 = vmatprep.subr.mxu0 0.0
    %116 = vmatpush1.msra.mxu0 0.0
    %117 = vmatprep.subr.mxu0 0.0
    %118 = vmatpush1.msra.mxu0 0.0
    %119 = vmatprep.subr.mxu0 0.0
    %120 = vmatpush1.msra.mxu0 0.0
    %121 = vmatprep.subr.mxu0 0.0
    %122 = vmatpush1.msra.mxu0 0.0
    %123 = vmatprep.subr.mxu0 0.0
    %124 = vmatpush1.msra.mxu0 0.0
    %125 = vmatprep.subr.mxu0 0.0
    %126 = vmatpush1.msra.mxu0 0.0
    %127 = vmatprep.subr.mxu0 0.0
    %128 = vmatpush1.msra.mxu0 0.0
    %129 = vmatprep.subr.mxu0 0.0
    %130 = vmatpush1.msra.mxu0 0.0
    %131 = vmatprep.subr.mxu0 0.0
    %132 = vmatpush1.msra.mxu0 0.0
    %133 = vmatprep.subr.mxu0 0.0
    %134 = vmatpush1.msra.mxu0 0.0
    %135 = vmatprep.subr.mxu0 0.0
    %136 = vmatpush1.msra.mxu0 0.0
    %137 = vmatprep.subr.mxu0 0.0
    %138 = vmatpush1.msra.mxu0 0.0
    %139 = vmatprep.subr.mxu0 0.0
    %140 = vmatpush1.msra.mxu0 0.0
    %141 = vmatprep.subr.mxu0 0.0
    %142 = vmatpush1.msra.mxu0 0.0
    %143 = vmatprep.subr.mxu0 0.0
    %144 = vmatpush1.msra.mxu0 0.0
    %145 = vmatprep.subr.mxu0 0.0
    %146 = vmatpush1.msra.mxu0 0.0
    %147 = vmatprep.subr.mxu0 0.0
    %148 = vmatpush1.msra.mxu0 0.0
    %149 = vmatprep.subr.mxu0 0.0
    %150 = vmatpush1.msra.mxu0 0.0
    %151 = vmatprep.subr.mxu0 0.0
    %152 = vmatpush1.msra.mxu0 0.0
    %153 = vmatprep.subr.mxu0 0.0
    %154 = vmatpush1.msra.mxu0 0.0
    %155 = vmatprep.subr.mxu0 0.0
    %156 = vmatpush1.msra.mxu0 0.0
    %157 = vmatprep.subr.mxu0 0.0
    %158 = vmatpush1.msra.mxu0 0.0
    %159 = vmatprep.subr.mxu0 0.0
    %160 = vmatpush1.msra.mxu0 0.0
    %161 = vmatprep.subr.mxu0 0.0
    %162 = vmatpush1.msra.mxu0 0.0
    %163 = vmatprep.subr.mxu0 0.0
    %164 = vmatpush1.msra.mxu0 0.0
    %165 = vmatprep.subr.mxu0 0.0
    %166 = vmatpush1.msra.mxu0 0.0
    %167 = vmatprep.subr.mxu0 0.0
    %168 = vmatpush1.msra.mxu0 0.0
    %169 = vmatprep.subr.mxu0 0.0
    %170 = vmatpush1.msra.mxu0 0.0
    %171 = vmatprep.mubr.f32.mxu0 0.0
    %172 = vmatmul.mubr.f32.gmra.mrb[0].mxu0 %v105
    %v173 = vpop.f32.mrb[0].mxu0
    %v174 = vadd.f32 %v102, %v173
    %v175 = vpop.f32.mrb[0].mxu0
    %176 = vdwg.mxu0
    %v177 = vmax.f32 %v174, 0.0
    %v178 = vld [vmem:[#allocation7] sm:$0xff]
    %v179 = vld [vmem:[#allocation7 + $0x8] sm:$0xff]
    %v180 = vld [vmem:[#allocation7 + $0x10] sm:$0xff]
    %v181 = vld [vmem:[#allocation7 + $0x18] sm:$0xff]
    %v182 = vld [vmem:[#allocation7 + $0x20] sm:$0xff]
    %v183 = vld [vmem:[#allocation7 + $0x28] sm:$0xff]
    %v184 = vld [vmem:[#allocation7 + $0x30] sm:$0xff]
    %v185 = vld [vmem:[#allocation7 + $0x38] sm:$0xff]
    %v186 = vld [vmem:[#allocation7 + $0x40] sm:$0xff]
    %v187 = vld [vmem:[#allocation7 + $0x48] sm:$0xff]
    %v188 = vld [vmem:[#allocation7 + $0x50] sm:$0xff]
    %v189 = vld [vmem:[#allocation7 + $0x58] sm:$0xff]
    %v190 = vld [vmem:[#allocation7 + $0x60] sm:$0xff]
    %v191 = vld [vmem:[#allocation7 + $0x68] sm:$0xff]
    %v192 = vld [vmem:[#allocation7 + $0x70] sm:$0xff]
    %v193 = vld [vmem:[#allocation7 + $0x78] sm:$0xff]
    %v194 = vlaneseq
    %v195 = vshrl.u32 %v194, 7
    %v196 = vsub.s32 0, %v195
    %v197 = vrot.slane %v91, %v196
    %198 = vmatprep.subr.mxu0 0.0
    %199 = vmatpush1.msra.mxu0 %v178
    %200 = vmatprep.subr.mxu0 0.0
    %201 = vmatpush1.msra.mxu0 %v179
    %202 = vmatprep.subr.mxu0 0.0
    %203 = vmatpush1.msra.mxu0 %v180
    %204 = vmatprep.subr.mxu0 0.0
    %205 = vmatpush1.msra.mxu0 %v181
    %206 = vmatprep.subr.mxu0 0.0
    %207 = vmatpush1.msra.mxu0 %v182
    %208 = vmatprep.subr.mxu0 0.0
    %209 = vmatpush1.msra.mxu0 %v183
    %210 = vmatprep.subr.mxu0 0.0
    %211 = vmatpush1.msra.mxu0 %v184
    %212 = vmatprep.subr.mxu0 0.0
    %213 = vmatpush1.msra.mxu0 %v185
    %214 = vmatprep.subr.mxu0 0.0
    %215 = vmatpush1.msra.mxu0 %v186
    %216 = vmatprep.subr.mxu0 0.0
    %217 = vmatpush1.msra.mxu0 %v187
    %218 = vmatprep.subr.mxu0 0.0
    %219 = vmatpush1.msra.mxu0 %v188
    %220 = vmatprep.subr.mxu0 0.0
    %221 = vmatpush1.msra.mxu0 %v189
    %222 = vmatprep.subr.mxu0 0.0
    %223 = vmatpush1.msra.mxu0 %v190
    %224 = vmatprep.subr.mxu0 0.0
    %225 = vmatpush1.msra.mxu0 %v191
    %226 = vmatprep.subr.mxu0 0.0
    %227 = vmatpush1.msra.mxu0 %v192
    %228 = vmatprep.subr.mxu0 0.0
    %229 = vmatpush1.msra.mxu0 %v193
    %230 = vmatprep.subr.mxu0 0.0
    %231 = vmatpush1.msra.mxu0 0.0
    %232 = vmatprep.subr.mxu0 0.0
    %233 = vmatpush1.msra.mxu0 0.0
    %234 = vmatprep.subr.mxu0 0.0
    %235 = vmatpush1.msra.mxu0 0.0
    %236 = vmatprep.subr.mxu0 0.0
    %237 = vmatpush1.msra.mxu0 0.0
    %238 = vmatprep.subr.mxu0 0.0
    %239 = vmatpush1.msra.mxu0 0.0
    %240 = vmatprep.subr.mxu0 0.0
    %241 = vmatpush1.msra.mxu0 0.0
    %242 = vmatprep.subr.mxu0 0.0
    %243 = vmatpush1.msra.mxu0 0.0
    %244 = vmatprep.subr.mxu0 0.0
    %245 = vmatpush1.msra.mxu0 0.0
    %246 = vmatprep.subr.mxu0 0.0
    %247 = vmatpush1.msra.mxu0 0.0
    %248 = vmatprep.subr.mxu0 0.0
    %249 = vmatpush1.msra.mxu0 0.0
    %250 = vmatprep.subr.mxu0 0.0
    %251 = vmatpush1.msra.mxu0 0.0
    %252 = vmatprep.subr.mxu0 0.0
    %253 = vmatpush1.msra.mxu0 0.0
    %254 = vmatprep.subr.mxu0 0.0
    %255 = vmatpush1.msra.mxu0 0.0
    %256 = vmatprep.subr.mxu0 0.0
    %257 = vmatpush1.msra.mxu0 0.0
    %258 = vmatprep.subr.mxu0 0.0
    %259 = vmatpush1.msra.mxu0 0.0
    %260 = vmatprep.subr.mxu0 0.0
    %261 = vmatpush1.msra.mxu0 0.0
    %262 = vmatprep.mubr.f32.mxu0 0.0
    %263 = vmatmul.mubr.f32.gmra.mrb[0].mxu0 %v177
    %v264 = vpop.f32.mrb[0].mxu0
    %v265 = vadd.f32 %v197, %v264
    %v266 = vpop.f32.mrb[0].mxu0
    %267 = vdwg.mxu0
    %v268 = vmax.f32 %v265, 0.0
    %v269 = vld [vmem:[#allocation8] sm:$0xff]
    %v270 = vld [vmem:[#allocation8 + $0x8] sm:$0xff]
    %v271 = vld [vmem:[#allocation8 + $0x10] sm:$0xff]
    %v272 = vld [vmem:[#allocation8 + $0x18] sm:$0xff]
    %v273 = vld [vmem:[#allocation8 + $0x20] sm:$0xff]
    %v274 = vld [vmem:[#allocation8 + $0x28] sm:$0xff]
    %v275 = vld [vmem:[#allocation8 + $0x30] sm:$0xff]
    %v276 = vld [vmem:[#allocation8 + $0x38] sm:$0xff]
    %v277 = vld [vmem:[#allocation8 + $0x40] sm:$0xff]
    %v278 = vld [vmem:[#allocation8 + $0x48] sm:$0xff]
    %v279 = vld [vmem:[#allocation8 + $0x50] sm:$0xff]
    %v280 = vld [vmem:[#allocation8 + $0x58] sm:$0xff]
    %v281 = vld [vmem:[#allocation8 + $0x60] sm:$0xff]
    %v282 = vld [vmem:[#allocation8 + $0x68] sm:$0xff]
    %v283 = vld [vmem:[#allocation8 + $0x70] sm:$0xff]
    %v284 = vld [vmem:[#allocation8 + $0x78] sm:$0xff]
    %v285 = vlaneseq
    %v286 = vshrl.u32 %v285, 7
    %v287 = vsub.s32 0, %v286
    %v288 = vrot.slane %v92, %v287
    %289 = vmatprep.subr.mxu0 0.0
    %290 = vmatpush1.msra.mxu0 %v269
    %291 = vmatprep.subr.mxu0 0.0
    %292 = vmatpush1.msra.mxu0 %v270
    %293 = vmatprep.subr.mxu0 0.0
    %294 = vmatpush1.msra.mxu0 %v271
    %295 = vmatprep.subr.mxu0 0.0
    %296 = vmatpush1.msra.mxu0 %v272
    %297 = vmatprep.subr.mxu0 0.0
    %298 = vmatpush1.msra.mxu0 %v273
    %299 = vmatprep.subr.mxu0 0.0
    %300 = vmatpush1.msra.mxu0 %v274
    %301 = vmatprep.subr.mxu0 0.0
    %302 = vmatpush1.msra.mxu0 %v275
    %303 = vmatprep.subr.mxu0 0.0
    %304 = vmatpush1.msra.mxu0 %v276
    %305 = vmatprep.subr.mxu0 0.0
    %306 = vmatpush1.msra.mxu0 %v277
    %307 = vmatprep.subr.mxu0 0.0
    %308 = vmatpush1.msra.mxu0 %v278
    %309 = vmatprep.subr.mxu0 0.0
    %310 = vmatpush1.msra.mxu0 %v279
    %311 = vmatprep.subr.mxu0 0.0
    %312 = vmatpush1.msra.mxu0 %v280
    %313 = vmatprep.subr.mxu0 0.0
    %314 = vmatpush1.msra.mxu0 %v281
    %315 = vmatprep.subr.mxu0 0.0
    %316 = vmatpush1.msra.mxu0 %v282
    %317 = vmatprep.subr.mxu0 0.0
    %318 = vmatpush1.msra.mxu0 %v283
    %319 = vmatprep.subr.mxu0 0.0
    %320 = vmatpush1.msra.mxu0 %v284
    %321 = vmatprep.subr.mxu0 0.0
    %322 = vmatpush1.msra.mxu0 0.0
    %323 = vmatprep.subr.mxu0 0.0
    %324 = vmatpush1.msra.mxu0 0.0
    %325 = vmatprep.subr.mxu0 0.0
    %326 = vmatpush1.msra.mxu0 0.0
    %327 = vmatprep.subr.mxu0 0.0
    %328 = vmatpush1.msra.mxu0 0.0
    %329 = vmatprep.subr.mxu0 0.0
    %330 = vmatpush1.msra.mxu0 0.0
    %331 = vmatprep.subr.mxu0 0.0
    %332 = vmatpush1.msra.mxu0 0.0
    %333 = vmatprep.subr.mxu0 0.0
    %334 = vmatpush1.msra.mxu0 0.0
    %335 = vmatprep.subr.mxu0 0.0
    %336 = vmatpush1.msra.mxu0 0.0
    %337 = vmatprep.subr.mxu0 0.0
    %338 = vmatpush1.msra.mxu0 0.0
    %339 = vmatprep.subr.mxu0 0.0
    %340 = vmatpush1.msra.mxu0 0.0
    %341 = vmatprep.subr.mxu0 0.0
    %342 = vmatpush1.msra.mxu0 0.0
    %343 = vmatprep.subr.mxu0 0.0
    %344 = vmatpush1.msra.mxu0 0.0
    %345 = vmatprep.subr.mxu0 0.0
    %346 = vmatpush1.msra.mxu0 0.0
    %347 = vmatprep.subr.mxu0 0.0
    %348 = vmatpush1.msra.mxu0 0.0
    %349 = vmatprep.subr.mxu0 0.0
    %350 = vmatpush1.msra.mxu0 0.0
    %351 = vmatprep.subr.mxu0 0.0
    %352 = vmatpush1.msra.mxu0 0.0
    %353 = vmatprep.mubr.f32.mxu0 0.0
    %354 = vmatmul.mubr.f32.gmra.mrb[0].mxu0 %v268
    %v355 = vpop.f32.mrb[0].mxu0
    %v356 = vadd.f32 %v288, %v355
    %v357 = vpop.f32.mrb[0].mxu0
    %358 = vdwg.mxu0
    %v359 = vmax.f32 %v356, 0.0
    %v360 = vld [vmem:[#allocation10] sm:$0xff]
    %v361 = vld [vmem:[#allocation10 + $0x8] sm:$0xff]
    %v362 = vld [vmem:[#allocation10 + $0x10] sm:$0xff]
    %v363 = vld [vmem:[#allocation10 + $0x18] sm:$0xff]
    %v364 = vld [vmem:[#allocation10 + $0x20] sm:$0xff]
    %v365 = vld [vmem:[#allocation10 + $0x28] sm:$0xff]
    %v366 = vld [vmem:[#allocation10 + $0x30] sm:$0xff]
    %v367 = vld [vmem:[#allocation10 + $0x38] sm:$0xff]
    %v368 = vld [vmem:[#allocation10 + $0x40] sm:$0xff]
    %v369 = vld [vmem:[#allocation10 + $0x48] sm:$0xff]
    %v370 = vld [vmem:[#allocation10 + $0x50] sm:$0xff]
    %v371 = vld [vmem:[#allocation10 + $0x58] sm:$0xff]
    %v372 = vld [vmem:[#allocation10 + $0x60] sm:$0xff]
    %v373 = vld [vmem:[#allocation10 + $0x68] sm:$0xff]
    %v374 = vld [vmem:[#allocation10 + $0x70] sm:$0xff]
    %v375 = vld [vmem:[#allocation10 + $0x78] sm:$0xff]
    %v376 = vlaneseq
    %v377 = vshrl.u32 %v376, 7
    %v378 = vsub.s32 0, %v377
    %v379 = vrot.slane %v93, %v378
    %380 = vmatprep.subr.mxu0 0.0
    %381 = vmatpush1.msra.mxu0 %v360
    %382 = vmatprep.subr.mxu0 0.0
    %383 = vmatpush1.msra.mxu0 %v361
    %384 = vmatprep.subr.mxu0 0.0
    %385 = vmatpush1.msra.mxu0 %v362
    %386 = vmatprep.subr.mxu0 0.0
    %387 = vmatpush1.msra.mxu0 %v363
    %388 = vmatprep.subr.mxu0 0.0
    %389 = vmatpush1.msra.mxu0 %v364
    %390 = vmatprep.subr.mxu0 0.0
    %391 = vmatpush1.msra.mxu0 %v365
    %392 = vmatprep.subr.mxu0 0.0
    %393 = vmatpush1.msra.mxu0 %v366
    %394 = vmatprep.subr.mxu0 0.0
    %395 = vmatpush1.msra.mxu0 %v367
    %396 = vmatprep.subr.mxu0 0.0
    %397 = vmatpush1.msra.mxu0 %v368
    %398 = vmatprep.subr.mxu0 0.0
    %399 = vmatpush1.msra.mxu0 %v369
    %400 = vmatprep.subr.mxu0 0.0
    %401 = vmatpush1.msra.mxu0 %v370
    %402 = vmatprep.subr.mxu0 0.0
    %403 = vmatpush1.msra.mxu0 %v371
    %404 = vmatprep.subr.mxu0 0.0
    %405 = vmatpush1.msra.mxu0 %v372
    %406 = vmatprep.subr.mxu0 0.0
    %407 = vmatpush1.msra.mxu0 %v373
    %408 = vmatprep.subr.mxu0 0.0
    %409 = vmatpush1.msra.mxu0 %v374
    %410 = vmatprep.subr.mxu0 0.0
    %411 = vmatpush1.msra.mxu0 %v375
    %412 = vmatprep.subr.mxu0 0.0
    %413 = vmatpush1.msra.mxu0 0.0
    %414 = vmatprep.subr.mxu0 0.0
    %415 = vmatpush1.msra.mxu0 0.0
    %416 = vmatprep.subr.mxu0 0.0
    %417 = vmatpush1.msra.mxu0 0.0
    %418 = vmatprep.subr.mxu0 0.0
    %419 = vmatpush1.msra.mxu0 0.0
    %420 = vmatprep.subr.mxu0 0.0
    %421 = vmatpush1.msra.mxu0 0.0
    %422 = vmatprep.subr.mxu0 0.0
    %423 = vmatpush1.msra.mxu0 0.0
    %424 = vmatprep.subr.mxu0 0.0
    %425 = vmatpush1.msra.mxu0 0.0
    %426 = vmatprep.subr.mxu0 0.0
    %427 = vmatpush1.msra.mxu0 0.0
    %428 = vmatprep.subr.mxu0 0.0
    %429 = vmatpush1.msra.mxu0 0.0
    %430 = vmatprep.subr.mxu0 0.0
    %431 = vmatpush1.msra.mxu0 0.0
    %432 = vmatprep.subr.mxu0 0.0
    %433 = vmatpush1.msra.mxu0 0.0
    %434 = vmatprep.subr.mxu0 0.0
    %435 = vmatpush1.msra.mxu0 0.0
    %436 = vmatprep.subr.mxu0 0.0
    %437 = vmatpush1.msra.mxu0 0.0
    %438 = vmatprep.subr.mxu0 0.0
    %439 = vmatpush1.msra.mxu0 0.0
    %440 = vmatprep.subr.mxu0 0.0
    %441 = vmatpush1.msra.mxu0 0.0
    %442 = vmatprep.subr.mxu0 0.0
    %443 = vmatpush1.msra.mxu0 0.0
    %444 = vmatprep.mubr.f32.mxu0 0.0
    %445 = vmatmul.mubr.f32.gmra.mrb[0].mxu0 %v359
    %v446 = vpop.f32.mrb[0].mxu0
    %v447 = vadd.f32 %v379, %v446
    %v448 = vpop.f32.mrb[0].mxu0
    %449 = vdwg.mxu0
    %450 = vst [vmem:[#allocation11] sm:$0xff] %v447
    // Predicated region
    $region46: #{tpu_custom_call.1} parent=1 // pred_check
      _
    $region47: #{tpu_custom_call.1} parent=1 // pred_check_branch
      %452 = sbr.rel (0) target = $region49
    $region48: #{tpu_custom_call.1} parent=1 // pred_region
      %s454 = ssub.s32 128, 128
      %455 = vsyncadd [#allocation4], %s454
      %s457 = sshll.u32 [#allocation11], 4
      %s458 = int_to_ptr.vmem [resolvable:$true] %s457
      %460 = dma.vmem_to_hbm [thread:$0]  %s458, 128, %s6, [#allocation4]
    $region49: #{tpu_custom_call.1} parent=1 // pred_fallthru
      _
    // Predicated region
    $region50: #{tpu_custom_call.1} parent=1 // pred_check
      _
    $region51: #{tpu_custom_call.1} parent=1 // pred_check_branch
      %462 = sbr.rel (0) target = $region53
    $region52: #{tpu_custom_call.1} parent=1 // pred_region
      %463 = dma.done [#allocation4], 128
    $region53: #{tpu_custom_call.1} parent=1 // pred_fallthru
      _
    %464 = vsyncpa [#allocation3], 1
    %465 = vsyncpa [#allocation6], 1
    %466 = vsyncpa [#allocation9], 1
    %467 = vsyncpa [#allocation4], 1

</llo_original>
